<compile_context>
chip_gen: v7x
topology: tpu7x:2x2x1
jax: 0.10.0
libtpu: 0.0.40
codegen_flags: <defaults>
</compile_context>

<pallas_src>
import functools

import jax
import jax.numpy as jnp
from jax import lax
from jax.experimental import pallas as pl
from jax.experimental.pallas import tpu as pltpu

NEG_BIG = -1e30          # finite "-inf" for masking (avoids NaN in online softmax)
VMEM_LIMIT = 32 * 1024 * 1024


def _pick_tile(dim, target, align):
    """Largest tile <= target that divides `dim` and is a multiple of `align`
    (falls back to the full dim, which always satisfies the layout rules)."""
    if dim <= target:
        return dim
    t = (target // align) * align
    while t >= align:
        if dim % t == 0:
            return t
        t -= align
    return dim


# ----------------------------------------------------------------------------
# Tiled linear:  out = x @ W.T + b      (x: (M, K), W: (N, K), b: (N,))
# ----------------------------------------------------------------------------
def _linear_kernel(x_ref, w_ref, b_ref, o_ref, acc_ref):
    @pl.when(pl.program_id(2) == 0)
    def _():
        acc_ref[...] = jnp.zeros_like(acc_ref)

    # contract the K (last) dims directly — no transposed copy of W.
    acc_ref[...] += lax.dot_general(
        x_ref[...], w_ref[...],
        dimension_numbers=(((1,), (1,)), ((), ())),
        preferred_element_type=jnp.float32)

    @pl.when(pl.program_id(2) == pl.num_programs(2) - 1)
    def _():
        o_ref[...] = (acc_ref[...] + b_ref[...].astype(jnp.float32)).astype(o_ref.dtype)


def linear_pallas(x2d, w, b):
    """x2d: (M, K), w: (N, K) [torch layout], b: (N,) -> (M, N)."""
    m, k = x2d.shape
    n = w.shape[0]
    tm = _pick_tile(m, 512, 8)
    tn = _pick_tile(n, 256, 128)
    tk = _pick_tile(k, 512, 128)
    grid = (m // tm, n // tn, k // tk)
    return pl.pallas_call(
        _linear_kernel,
        out_shape=jax.ShapeDtypeStruct((m, n), x2d.dtype),
        grid=grid,
        in_specs=[
            pl.BlockSpec((tm, tk), lambda i, j, kk: (i, kk)),
            pl.BlockSpec((tn, tk), lambda i, j, kk: (j, kk)),
            pl.BlockSpec((1, tn), lambda i, j, kk: (0, j)),
        ],
        out_specs=pl.BlockSpec((tm, tn), lambda i, j, kk: (i, j)),
        scratch_shapes=[pltpu.VMEM((tm, tn), jnp.float32)],
        compiler_params=pltpu.CompilerParams(
            dimension_semantics=("parallel", "parallel", "arbitrary"),
            vmem_limit_bytes=VMEM_LIMIT),
    )(x2d, w, b.reshape(1, n))


# ----------------------------------------------------------------------------
# GQA attention: grid (batch, kv_head, kv_block), flash-style online softmax.
# Q tile is (qg*S, dh) (query groups folded into the rows).
# ----------------------------------------------------------------------------
def _gqa_attn_kernel(q_ref, k_ref, v_ref, bias_ref, o_ref,
                     m_sc, l_sc, acc_sc, *, scale):
    kv = pl.program_id(2)

    @pl.when(kv == 0)
    def _():
        m_sc[...] = jnp.full_like(m_sc, NEG_BIG)
        l_sc[...] = jnp.zeros_like(l_sc)
        acc_sc[...] = jnp.zeros_like(acc_sc)

    # fold softmax scale into Q (O(rows*dh) instead of O(rows*tkv) multiply)
    q = q_ref[...] * jnp.asarray(scale, q_ref.dtype)           # (rows, dh)
    s_blk = lax.dot_general(                                   # (rows, tkv)
        q, k_ref[...],
        dimension_numbers=(((1,), (1,)), ((), ())),
        preferred_element_type=jnp.float32)
    s_blk = s_blk + bias_ref[...]                              # additive mask

    m_prev = m_sc[...]
    m_new = jnp.maximum(m_prev, jnp.max(s_blk, axis=-1, keepdims=True))
    alpha = jnp.exp(m_prev - m_new)
    p = jnp.exp(s_blk - m_new)
    l_sc[...] = alpha * l_sc[...] + jnp.sum(p, axis=-1, keepdims=True)
    acc_sc[...] = alpha * acc_sc[...] + jnp.dot(
        p.astype(v_ref.dtype), v_ref[...], preferred_element_type=jnp.float32)
    m_sc[...] = m_new

    @pl.when(kv == pl.num_programs(2) - 1)
    def _():
        o_ref[...] = (acc_sc[...] *
                      pl.reciprocal(l_sc[...], approx=True)).astype(o_ref.dtype)


def gqa_attention_pallas(q, k, v, bias, scale):
    """q: (b, kvh, qg*s, dh), k/v: (b, kvh, s, dh), bias: (qg*s, s) additive f32."""
    b, kvh, rows, dh = q.shape
    s = k.shape[2]
    tkv = _pick_tile(s, 512, 128)
    grid = (b, kvh, s // tkv)
    kernel = functools.partial(_gqa_attn_kernel, scale=scale)
    return pl.pallas_call(
        kernel,
        out_shape=jax.ShapeDtypeStruct((b, kvh, rows, dh), q.dtype),
        grid=grid,
        in_specs=[
            pl.BlockSpec((None, None, rows, dh), lambda bi, hi, kv: (bi, hi, 0, 0)),
            pl.BlockSpec((None, None, tkv, dh), lambda bi, hi, kv: (bi, hi, kv, 0)),
            pl.BlockSpec((None, None, tkv, dh), lambda bi, hi, kv: (bi, hi, kv, 0)),
            pl.BlockSpec((rows, tkv), lambda bi, hi, kv: (0, kv)),
        ],
        out_specs=pl.BlockSpec((None, None, rows, dh),
                               lambda bi, hi, kv: (bi, hi, 0, 0)),
        scratch_shapes=[
            pltpu.VMEM((rows, 1), jnp.float32),    # running max
            pltpu.VMEM((rows, 1), jnp.float32),    # running sum
            pltpu.VMEM((rows, dh), jnp.float32),   # running accumulator
        ],
        compiler_params=pltpu.CompilerParams(
            dimension_semantics=("parallel", "parallel", "arbitrary"),
            vmem_limit_bytes=VMEM_LIMIT),
    )(q, k, v, bias)


# ----------------------------------------------------------------------------
# Glue (plain JAX): RoPE, parameter init, full forward
# ----------------------------------------------------------------------------
# TODO(synk): `apply_rope` is not defined in the source module; implementing the
# standard Mistral pair-interleaved rotary embedding (identity when rope_freq is None).
def apply_rope(x, rope_freq):
    if rope_freq is None:
        return x
    cos, sin = rope_freq                     # each (s, d_head // 2)
    x1 = x[..., 0::2]
    x2 = x[..., 1::2]
    cos = cos[None, :, None, :]
    sin = sin[None, :, None, :]
    r1 = x1 * cos - x2 * sin
    r2 = x1 * sin + x2 * cos
    return jnp.stack([r1, r2], axis=-1).reshape(x.shape).astype(x.dtype)


def init_params(key, q_heads, kv_heads, d):
    d_head = d // q_heads
    ks = jax.random.split(key, 8)

    def lin(kw, kb, out_f, in_f):
        bound = 1.0 / (in_f ** 0.5)
        w = jax.random.uniform(kw, (out_f, in_f), jnp.float32, -bound, bound)
        bvec = jax.random.uniform(kb, (out_f,), jnp.float32, -bound, bound)
        return w, bvec

    wq, bq = lin(ks[0], ks[1], d_head * q_heads, d)
    wk, bk = lin(ks[2], ks[3], d_head * kv_heads, d)
    wv, bv = lin(ks[4], ks[5], d_head * kv_heads, d)
    wo, bo = lin(ks[6], ks[7], d, d_head * q_heads)
    return dict(wq=wq, bq=bq, wk=wk, bk=bk, wv=wv, bv=bv, wo=wo, bo=bo)


def gqa_sa_forward(params, x, q_heads, kv_heads, rope_freq=None, mask=None):
    b, s, d = x.shape
    d_head = d // q_heads
    qg = q_heads // kv_heads
    scale = d_head ** (-0.5)

    x2d = x.reshape(b * s, d)
    q = linear_pallas(x2d, params["wq"], params["bq"]).reshape(b, s, q_heads, d_head)
    k = linear_pallas(x2d, params["wk"], params["bk"]).reshape(b, s, kv_heads, d_head)
    v = linear_pallas(x2d, params["wv"], params["bv"]).reshape(b, s, kv_heads, d_head)

    q = apply_rope(q, rope_freq)
    k = apply_rope(k, rope_freq)

    # Arrange Q as (b, kvh, qg*s, dh): row index = g*s + i with head = g*kvh + h,
    # matching torch's view(b, qg, kvh, s, dh) split (g outer, kv head inner).
    # TODO(synk): these XLA-level transposes could be folded into the attention
    # BlockSpecs (strided head gather), left as plain JAX for clarity.
    q5 = (q.reshape(b, s, qg, kv_heads, d_head)
           .transpose(0, 3, 2, 1, 4)
           .reshape(b, kv_heads, qg * s, d_head))
    k4 = k.transpose(0, 2, 1, 3)              # (b, kvh, s, dh)
    v4 = v.transpose(0, 2, 1, 3)              # (b, kvh, s, dh)

    # additive bias, tiled over query groups to match the folded (qg*s) rows
    if mask is None:
        bias = jnp.zeros((qg * s, s), jnp.float32)
    else:
        bias = jnp.where(mask == 0, jnp.float32(NEG_BIG), jnp.float32(0.0))
        bias = jnp.tile(bias, (qg, 1))

    out = gqa_attention_pallas(q5, k4, v4, bias, scale)   # (b, kvh, qg*s, dh)

    # (b, kvh, qg*s, dh) flattened per batch is exactly torch's
    # out.transpose(1, 2).contiguous().view(b, s, d) memory order.
    out = out.reshape(b, s, d)
    return linear_pallas(out.reshape(b * s, d), params["wo"], params["bo"]).reshape(b, s, d)


# ----------------------------------------------------------------------------
# Pure-JAX reference (mirrors the torch module exactly)
# ----------------------------------------------------------------------------
def gqa_sa_reference(params, x, q_heads, kv_heads, rope_freq=None, mask=None):
    b, s, d = x.shape
    d_head = d // q_heads
    qg = q_heads // kv_heads
    scale = d_head ** (-0.5)

    q = (x @ params["wq"].T + params["bq"]).reshape(b, s, q_heads, d_head)
    k = (x @ params["wk"].T + params["bk"]).reshape(b, s, kv_heads, d_head)
    v = (x @ params["wv"].T + params["bv"]).reshape(b, s, kv_heads, d_head)
    q = apply_rope(q, rope_freq)
    k = apply_rope(k, rope_freq)
    q = q.transpose(0, 2, 1, 3).reshape(b, qg, kv_heads, s, d_head)
    k = k.transpose(0, 2, 1, 3)
    v = v.transpose(0, 2, 1, 3)
    scores = jnp.einsum("bgksd,bktd->bgkst", q, k)
    if mask is not None:
        scores = jnp.where(mask == 0, -jnp.inf, scores)
    scores = jax.nn.softmax(scores * scale, axis=-1)
    out = jnp.einsum("bgkst,bktd->bgksd", scores, v)
    out = out.transpose(0, 2, 1, 3, 4).reshape(b, s, d)
    return out @ params["wo"].T + params["bo"]


# ----------------------------------------------------------------------------
if __name__ == "__main__":
    q_heads, kv_heads, d = 4, 2, 32
    b, s = 2, 8
    d_head = d // q_heads

    key = jax.random.PRNGKey(0)
    k_params, k_x = jax.random.split(key)
    params = init_params(k_params, q_heads, kv_heads, d)
    x = jax.random.normal(k_x, (b, s, d), jnp.float32)

    # Mistral-style rotary frequencies for a (s, d_head) rope
    inv_freq = 1.0 / (10000.0 ** (jnp.arange(0, d_head, 2, dtype=jnp.float32) / d_head))
    angles = jnp.arange(s, dtype=jnp.float32)[:, None] * inv_freq[None, :]
    rope_freq = (jnp.cos(angles), jnp.sin(angles))

    # causal mask (broadcast over batch/groups/heads, matching masked_fill semantics)
    mask = jnp.tril(jnp.ones((s, s), jnp.int32))

    out = gqa_sa_forward(params, x, q_heads, kv_heads, rope_freq=rope_freq, mask=mask)
    out = jax.block_until_ready(out)

    ref = gqa_sa_reference(params, x, q_heads, kv_heads, rope_freq=rope_freq, mask=mask)
    assert out.shape == (b, s, d)
    # tolerance accounts for the approximate (EUP) reciprocal in the softmax
    assert jnp.allclose(out, ref, atol=2e-3, rtol=2e-3), "mismatch vs pure-JAX reference"

    print("KERNEL_OK")
</pallas_src>

<mosaic_0001>
module attributes {stable_mosaic.version = 11 : i64} {
  func.func @_linear_kernel(%arg0: i32, %arg1: i32, %arg2: i32, %arg3: memref<16x32xf32, #tpu.memory_space<vmem>>, %arg4: memref<32x32xf32, #tpu.memory_space<vmem>>, %arg5: memref<1x32xf32, #tpu.memory_space<vmem>>, %arg6: memref<16x32xf32, #tpu.memory_space<vmem>>, %arg7: memref<16x32xf32, #tpu.memory_space<vmem>>) attributes {dimension_semantics = [#tpu.dimension_semantics<parallel>, #tpu.dimension_semantics<parallel>, #tpu.dimension_semantics<arbitrary>], iteration_bounds = array<i64: 1, 1, 1>, scalar_prefetch = 0 : i64, scratch_operands = 1 : i64, tpu.core_type = #tpu.core_type<tc>, window_params = [{transform_indices = @transform_0, window_bounds = array<i64: 16, 32>}, {transform_indices = @transform_1, window_bounds = array<i64: 32, 32>}, {transform_indices = @transform_2, window_bounds = array<i64: 1, 32>}, {transform_indices = @transform_3, window_bounds = array<i64: 16, 32>}]} {
    %c0_i32 = arith.constant 0 : i32
    %0 = arith.cmpi eq, %arg2, %c0_i32 : i32
    %1 = arith.extui %0 : i1 to i32
    %c0_i32_0 = arith.constant 0 : i32
    %2 = arith.cmpi ne, %1, %c0_i32_0 : i32
    scf.if %2 {
      %cst_10 = arith.constant 0.000000e+00 : f32
      %12 = vector.broadcast %cst_10 : f32 to vector<16x32xf32>
      %c0_11 = arith.constant 0 : index
      %c0_12 = arith.constant 0 : index
      %13 = vector.load %arg7[%c0_11, %c0_12] : memref<16x32xf32, #tpu.memory_space<vmem>>, vector<16x32xf32>
      tpu.vector_store %arg7[%c0_11, %c0_12], %12 {strides = array<i32>} : memref<16x32xf32, #tpu.memory_space<vmem>>, vector<16x32xf32>,
    } else {
    }
    %c0 = arith.constant 0 : index
    %c0_1 = arith.constant 0 : index
    %3 = vector.load %arg7[%c0, %c0_1] : memref<16x32xf32, #tpu.memory_space<vmem>>, vector<16x32xf32>
    %c0_2 = arith.constant 0 : index
    %c0_3 = arith.constant 0 : index
    %4 = vector.load %arg3[%c0_2, %c0_3] : memref<16x32xf32, #tpu.memory_space<vmem>>, vector<16x32xf32>
    %c0_4 = arith.constant 0 : index
    %c0_5 = arith.constant 0 : index
    %5 = vector.load %arg4[%c0_4, %c0_5] : memref<32x32xf32, #tpu.memory_space<vmem>>, vector<32x32xf32>
    %cst = arith.constant dense<0.000000e+00> : vector<16x32xf32>
    %6 = tpu.matmul %4, %5, %cst {dimension_numbers = #tpu.dot_dimension_numbers<[1], [1], [0], [0], [0, 0, 1, 0], [], []>} : vector<16x32xf32>, vector<32x32xf32>, vector<16x32xf32> -> vector<16x32xf32>
    %7 = arith.addf %3, %6 : vector<16x32xf32>
    %c0_6 = arith.constant 0 : index
    %c0_7 = arith.constant 0 : index
    %8 = vector.load %arg7[%c0_6, %c0_7] : memref<16x32xf32, #tpu.memory_space<vmem>>, vector<16x32xf32>
    tpu.vector_store %arg7[%c0_6, %c0_7], %7 {strides = array<i32>} : memref<16x32xf32, #tpu.memory_space<vmem>>, vector<16x32xf32>,
    %c0_i32_8 = arith.constant 0 : i32
    %9 = arith.cmpi eq, %arg2, %c0_i32_8 : i32
    %10 = arith.extui %9 : i1 to i32
    %c0_i32_9 = arith.constant 0 : i32
    %11 = arith.cmpi ne, %10, %c0_i32_9 : i32
    scf.if %11 {
      %c0_10 = arith.constant 0 : index
      %c0_11 = arith.constant 0 : index
      %12 = vector.load %arg7[%c0_10, %c0_11] : memref<16x32xf32, #tpu.memory_space<vmem>>, vector<16x32xf32>
      %c0_12 = arith.constant 0 : index
      %c0_13 = arith.constant 0 : index
      %13 = vector.load %arg5[%c0_12, %c0_13] : memref<1x32xf32, #tpu.memory_space<vmem>>, vector<1x32xf32>
      %14 = vector.broadcast %13 : vector<1x32xf32> to vector<16x32xf32>
      %15 = arith.addf %12, %14 : vector<16x32xf32>
      %c0_14 = arith.constant 0 : index
      %c0_15 = arith.constant 0 : index
      %16 = vector.load %arg6[%c0_14, %c0_15] : memref<16x32xf32, #tpu.memory_space<vmem>>, vector<16x32xf32>
      tpu.vector_store %arg6[%c0_14, %c0_15], %15 {strides = array<i32>} : memref<16x32xf32, #tpu.memory_space<vmem>>, vector<16x32xf32>,
    } else {
    }
    return
  }
  func.func @transform_0(%arg0: i32, %arg1: i32, %arg2: i32) -> (i32, i32) {
    %c0_i32 = arith.constant 0 : i32
    return %arg0, %arg2 : i32, i32
  }
  func.func @transform_1(%arg0: i32, %arg1: i32, %arg2: i32) -> (i32, i32) {
    %c0_i32 = arith.constant 0 : i32
    return %arg1, %arg2 : i32, i32
  }
  func.func @transform_2(%arg0: i32, %arg1: i32, %arg2: i32) -> (i32, i32) {
    %c0_i32 = arith.constant 0 : i32
    %c0_i32_0 = arith.constant 0 : i32
    return %c0_i32, %arg1 : i32, i32
  }
  func.func @transform_3(%arg0: i32, %arg1: i32, %arg2: i32) -> (i32, i32) {
    %c0_i32 = arith.constant 0 : i32
    return %arg0, %arg1 : i32, i32
  }
}

</mosaic_0001>

<llo_original>
// kernel: tpu_custom_call.1
$region0: #{tpu_custom_call.1}
  #allocation0 [shape = 'u32[]', space=smem, size = 0x4, offset = 0x4, fixed_abs, tag = 'smem constant byte address 0x4 - core index']
  #allocation1 [shape = 'u32[144,128]{1,0:T(1,128)}', space=vmem, size = 0x12000, scoped, tag = 'internal scratch']
  #allocation2 [shape = 'f32[16,32]{1,0:T(8,128)}', space=vmem, size = 0x2000, scoped, tag = 'scratch operand']
  %s0 = inlined_call_operand.hbm [shape: f32[16,32], index: 0, kind: input, shape index: {}]
  %s1 = inlined_call_operand.hbm [shape: f32[32,32], index: 1, kind: input, shape index: {}]
  %s2 = inlined_call_operand.vmem [shape: f32[1,32], index: 2, kind: input, shape index: {}]
  %s3 = inlined_call_operand.hbm [shape: f32[16,32], index: 3, kind: output, shape index: {}]
  %s4 = sld [smem:[#allocation0]]
  $region38: #{tpu_custom_call.1} parent=0
    _
  %s6 = ssub.s32 1, %s4
  %s7 = scalar_select 0, %s6, %s4
  $region1: #{tpu_custom_call.1} parent=0
    #allocation3 [shape = 'u8[8192]{0}', space=vmem, size = 0x2000, scoped, tag = 'input window, operand 0, single buffered']
    #allocation4 [shape = 's32[1]{0}', space=sflag, size = 0x4, scoped, tag = 'scoped memory for tpu_custom_call.1']
    #allocation5 [shape = 's32[1]{0}', space=sflag, size = 0x4, scoped, tag = 'scoped memory for tpu_custom_call.1']
    #allocation6 [shape = 'u8[16384]{0}', space=vmem, size = 0x4000, scoped, tag = 'input window, operand 1, single buffered']
    #allocation7 [shape = 's32[1]{0}', space=sflag, size = 0x4, scoped, tag = 'scoped memory for tpu_custom_call.1']
    #allocation8 [shape = 'u8[8192]{0}', space=vmem, size = 0x2000, scoped, tag = 'output window, operand 0, single buffered']
    %8 = vsyncpa [#allocation4], 0
    %9 = vsyncpa [#allocation7], 0
    %10 = vsyncpa [#allocation5], 0
    // Predicated region
    $region2: #{tpu_custom_call.1} parent=1 // pred_check
      _
    $region3: #{tpu_custom_call.1} parent=1 // pred_check_branch
      %12 = sbr.rel (0) target = $region5
    $region4: #{tpu_custom_call.1} parent=1 // pred_region
      %s14 = ssub.s32 256, 256
      %15 = vsyncadd [#allocation4], %s14
      %s16 = sshll.u32 [#allocation3], 4
      %s17 = int_to_ptr.vmem [resolvable:$true] %s16
      %22 = dma.hbm_to_vmem [thread:$0]  %s0, 256, %s17, [#allocation4], 128, 128, 8
    $region5: #{tpu_custom_call.1} parent=1 // pred_fallthru
      _
    // Predicated region
    $region6: #{tpu_custom_call.1} parent=1 // pred_check
      _
    $region7: #{tpu_custom_call.1} parent=1 // pred_check_branch
      %24 = sbr.rel (0) target = $region9
    $region8: #{tpu_custom_call.1} parent=1 // pred_region
      %s26 = ssub.s32 512, 512
      %27 = vsyncadd [#allocation7], %s26
      %s28 = sshll.u32 [#allocation6], 4
      %s29 = int_to_ptr.vmem [resolvable:$true] %s28
      %34 = dma.hbm_to_vmem [thread:$0]  %s1, 512, %s29, [#allocation7], 128, 128, 8
    $region9: #{tpu_custom_call.1} parent=1 // pred_fallthru
      _
    // Predicated region
    $region10: #{tpu_custom_call.1} parent=1 // pred_check
      _
    $region11: #{tpu_custom_call.1} parent=1 // pred_check_branch
      %36 = sbr.rel (0) target = $region13
    $region12: #{tpu_custom_call.1} parent=1 // pred_region
      _
    $region13: #{tpu_custom_call.1} parent=1 // pred_fallthru
      _
    // Predicated region
    $region14: #{tpu_custom_call.1} parent=1 // pred_check
      _
    $region15: #{tpu_custom_call.1} parent=1 // pred_check_branch
      %38 = sbr.rel (0) target = $region17
    $region16: #{tpu_custom_call.1} parent=1 // pred_region
      %39 = dma.done [#allocation4], 256
    $region17: #{tpu_custom_call.1} parent=1 // pred_fallthru
      _
    // Predicated region
    $region18: #{tpu_custom_call.1} parent=1 // pred_check
      _
    $region19: #{tpu_custom_call.1} parent=1 // pred_check_branch
      %41 = sbr.rel (0) target = $region21
    $region20: #{tpu_custom_call.1} parent=1 // pred_region
      %42 = dma.done [#allocation7], 512
    $region21: #{tpu_custom_call.1} parent=1 // pred_fallthru
      _
    %p43 = scmp.eq.s32.totalorder 0, 0
    // Predicated region
    $region22: #{tpu_custom_call.1} parent=1 // pred_check
      %p44 = pneg %p43
    $region23: #{tpu_custom_call.1} parent=1 // pred_check_branch
      %46 = sbr.rel (%p44) target = $region25
    $region24: #{tpu_custom_call.1} parent=1 // pred_region
      %vm47 = vcmask 261120
      %48 = vst.msk [vmem:[#allocation2] sm:$0xff] %vm47, 0.0
      %49 = vst.msk [vmem:[#allocation2 + $0x8] sm:$0xff] %vm47, 0.0
    $region25: #{tpu_custom_call.1} parent=1 // pred_fallthru
      _
    %v50 = vld [vmem:[#allocation2] sm:$0xff]
    %v51 = vld [vmem:[#allocation2 + $0x8] sm:$0xff]
    %v52 = vld [vmem:[#allocation3] sm:$0xff]
    %v53 = vld [vmem:[#allocation3 + $0x8] sm:$0xff]
    %v54 = vld [vmem:[#allocation6] sm:$0xff]
    %v55 = vld [vmem:[#allocation6 + $0x8] sm:$0xff]
    %v56 = vld [vmem:[#allocation6 + $0x10] sm:$0xff]
    %v57 = vld [vmem:[#allocation6 + $0x18] sm:$0xff]
    %vm58 = vcmask 261120
    %v60 = vsel %vm58, %v52, 0
    %v63 = vsel %vm58, %v53, 0
    %v66 = vsel %vm58, %v54, 0
    %v69 = vsel %vm58, %v55, 0
    %v72 = vsel %vm58, %v56, 0
    %v75 = vsel %vm58, %v57, 0
    %77 = vmatprep.subr.mxu0 0.0
    %78 = vmatpush1.xpose.msra.mxu0 %v66
    %79 = vmatprep.subr.mxu0 0.0
    %80 = vmatpush1.xpose.msra.mxu0 %v69
    %81 = vmatprep.subr.mxu0 0.0
    %82 = vmatpush1.xpose.msra.mxu0 %v72
    %83 = vmatprep.subr.mxu0 0.0
    %84 = vmatpush1.xpose.msra.mxu0 %v75
    %85 = vmatprep.subr.mxu0 0.0
    %86 = vmatpush1.xpose.msra.mxu0 0.0
    %87 = vmatprep.subr.mxu0 0.0
    %88 = vmatpush1.xpose.msra.mxu0 0.0
    %89 = vmatprep.subr.mxu0 0.0
    %90 = vmatpush1.xpose.msra.mxu0 0.0
    %91 = vmatprep.subr.mxu0 0.0
    %92 = vmatpush1.xpose.msra.mxu0 0.0
    %93 = vmatprep.subr.mxu0 0.0
    %94 = vmatpush1.xpose.msra.mxu0 0.0
    %95 = vmatprep.subr.mxu0 0.0
    %96 = vmatpush1.xpose.msra.mxu0 0.0
    %97 = vmatprep.subr.mxu0 0.0
    %98 = vmatpush1.xpose.msra.mxu0 0.0
    %99 = vmatprep.subr.mxu0 0.0
    %100 = vmatpush1.xpose.msra.mxu0 0.0
    %101 = vmatprep.subr.mxu0 0.0
    %102 = vmatpush1.xpose.msra.mxu0 0.0
    %103 = vmatprep.subr.mxu0 0.0
    %104 = vmatpush1.xpose.msra.mxu0 0.0
    %105 = vmatprep.subr.mxu0 0.0
    %106 = vmatpush1.xpose.msra.mxu0 0.0
    %107 = vmatprep.subr.mxu0 0.0
    %108 = vmatpush1.xpose.msra.mxu0 0.0
    %109 = vmatprep.subr.mxu0 0.0
    %110 = vmatpush1.xpose.msra.mxu0 0.0
    %111 = vmatprep.subr.mxu0 0.0
    %112 = vmatpush1.xpose.msra.mxu0 0.0
    %113 = vmatprep.subr.mxu0 0.0
    %114 = vmatpush1.xpose.msra.mxu0 0.0
    %115 = vmatprep.subr.mxu0 0.0
    %116 = vmatpush1.xpose.msra.mxu0 0.0
    %117 = vmatprep.subr.mxu0 0.0
    %118 = vmatpush1.xpose.msra.mxu0 0.0
    %119 = vmatprep.subr.mxu0 0.0
    %120 = vmatpush1.xpose.msra.mxu0 0.0
    %121 = vmatprep.subr.mxu0 0.0
    %122 = vmatpush1.xpose.msra.mxu0 0.0
    %123 = vmatprep.subr.mxu0 0.0
    %124 = vmatpush1.xpose.msra.mxu0 0.0
    %125 = vmatprep.subr.mxu0 0.0
    %126 = vmatpush1.xpose.msra.mxu0 0.0
    %127 = vmatprep.subr.mxu0 0.0
    %128 = vmatpush1.xpose.msra.mxu0 0.0
    %129 = vmatprep.subr.mxu0 0.0
    %130 = vmatpush1.xpose.msra.mxu0 0.0
    %131 = vmatprep.subr.mxu0 0.0
    %132 = vmatpush1.xpose.msra.mxu0 0.0
    %133 = vmatprep.subr.mxu0 0.0
    %134 = vmatpush1.xpose.msra.mxu0 0.0
    %135 = vmatprep.subr.mxu0 0.0
    %136 = vmatpush1.xpose.msra.mxu0 0.0
    %137 = vmatprep.subr.mxu0 0.0
    %138 = vmatpush1.xpose.msra.mxu0 0.0
    %139 = vmatprep.subr.mxu0 0.0
    %140 = vmatpush1.xpose.msra.mxu0 0.0
    %141 = vmatprep.mubr.f32.mxu0 0.0
    %142 = vmatmul.mubr.f32.gmra.mrb[0].mxu0 %v60
    %v143 = vpop.f32.mrb[0].mxu0
    %v144 = vadd.f32 0.0, %v143
    %v145 = vpop.f32.mrb[0].mxu0
    %146 = vmatprep.mubr.f32.mxu0 0.0
    %147 = vmatmul.mubr.f32.gmra.mrb[0].mxu0 %v63
    %v148 = vpop.f32.mrb[0].mxu0
    %v149 = vadd.f32 0.0, %v148
    %v150 = vpop.f32.mrb[0].mxu0
    %151 = vdwg.mxu0
    %v152 = vadd.f32 %v50, %v144
    %v153 = vadd.f32 %v51, %v149
    %154 = vst.msk [vmem:[#allocation2] sm:$0xff] %vm58, %v152
    %155 = vst.msk [vmem:[#allocation2 + $0x8] sm:$0xff] %vm58, %v153
    // Predicated region
    $region26: #{tpu_custom_call.1} parent=1 // pred_check
      %p156 = pneg %p43
    $region27: #{tpu_custom_call.1} parent=1 // pred_check_branch
      %158 = sbr.rel (%p156) target = $region29
    $region28: #{tpu_custom_call.1} parent=1 // pred_region
      %v159 = vld [vmem:[#allocation2] sm:$0xff]
      %v160 = vld [vmem:[#allocation2 + $0x8] sm:$0xff]
      %v161 = vld [vmem:[%s2] sm:$0x1]
      %v163 = vlaneseq
      %v164 = vshrl.u32 %v163, 7
      %v165 = vsub.s32 0, %v164
      %v166 = vrot.slane %v161, %v165
      %v168 = vadd.f32 %v159, %v166
      %v169 = vadd.f32 %v160, %v166
      %170 = vst.msk [vmem:[#allocation8] sm:$0xff] %vm58, %v168
      %171 = vst.msk [vmem:[#allocation8 + $0x8] sm:$0xff] %vm58, %v169
    $region29: #{tpu_custom_call.1} parent=1 // pred_fallthru
      _
    // Predicated region
    $region30: #{tpu_custom_call.1} parent=1 // pred_check
      _
    $region31: #{tpu_custom_call.1} parent=1 // pred_check_branch
      %173 = sbr.rel (0) target = $region33
    $region32: #{tpu_custom_call.1} parent=1 // pred_region
      %s175 = ssub.s32 256, 256
      %176 = vsyncadd [#allocation5], %s175
      %s177 = sshll.u32 [#allocation8], 4
      %s178 = int_to_ptr.vmem [resolvable:$true] %s177
      %183 = dma.vmem_to_hbm [thread:$0]  %s178, 256, %s3, [#allocation5], 128, 128, 8
    $region33: #{tpu_custom_call.1} parent=1 // pred_fallthru
      _
    // Predicated region
    $region34: #{tpu_custom_call.1} parent=1 // pred_check
      _
    $region35: #{tpu_custom_call.1} parent=1 // pred_check_branch
      %185 = sbr.rel (0) target = $region37
    $region36: #{tpu_custom_call.1} parent=1 // pred_region
      %186 = dma.done [#allocation5], 256
    $region37: #{tpu_custom_call.1} parent=1 // pred_fallthru
      _
    %187 = vsyncpa [#allocation4], 1
    %188 = vsyncpa [#allocation7], 1
    %189 = vsyncpa [#allocation5], 1

</llo_original>
